<compile_context>
chip_gen: v7x
topology: tpu7x:2x2x1
jax: 0.10.0
libtpu: 0.0.40
codegen_flags: <defaults>
</compile_context>

<pallas_src>
import functools

import numpy as np
import jax
import jax.numpy as jnp
from jax.experimental import pallas as pl
from jax.experimental.pallas import tpu as pltpu


def time_encode_kernel(t_ref, w_ref, b_ref, o_ref, *, fold):
    # t_ref: (tile, fold)  f32 timestamps, `fold` logical rows per kernel row
    # w_ref: (fold, lanes) f32, row r = weight vector masked to lane-group r
    # b_ref: (1, lanes)    f32, bias tiled per lane-group
    # o_ref: (tile, lanes) f32
    t = t_ref[...]
    w = w_ref[...]
    acc = t[:, 0:1] * w[0:1, :] + b_ref[...]
    for r in range(1, fold):
        acc = acc + t[:, r:r + 1] * w[r:r + 1, :]
    o_ref[...] = jnp.cos(acc)


def _round_up(x, m):
    return ((x + m - 1) // m) * m


def time_encode(t, weight, bias, *, tile_rows=4096):
    """t: any shape. weight: (D,) = Linear(1, D).weight[:, 0]. bias: (D,). Returns (N, D) f32."""
    d = int(weight.shape[0])
    t_flat = t.reshape(-1).astype(jnp.float32)
    n = int(t_flat.shape[0])
    if n == 0:
        return jnp.zeros((0, d), jnp.float32)

    # Lane-dense output layout: fold F = 128 // D logical rows per 128-lane kernel row
    # when D divides 128; otherwise pad lanes up to the next multiple of 128.
    if d % 128 == 0:
        fold, d_pad = 1, d
    elif 128 % d == 0:
        fold, d_pad = 128 // d, d
    else:
        # NOTE: (d_pad - d)/d_pad of the stores + cos work is wasted here, and the
        # [:, :d] epilogue slice re-copies the output.  Acceptable for unlucky D.
        fold, d_pad = 1, _round_up(d, 128)
    lanes = fold * d_pad

    w_row = weight.astype(jnp.float32).reshape(d)
    b_row = bias.astype(jnp.float32).reshape(d)
    if d_pad != d:
        w_row = jnp.pad(w_row, (0, d_pad - d))
        b_row = jnp.pad(b_row, (0, d_pad - d))
    # Masked per-group weight rows: w_arg[r, r*d_pad + j] = w[j], zero elsewhere.
    w_arg = jnp.kron(jnp.eye(fold, dtype=jnp.float32), w_row.reshape(1, d_pad))
    b_arg = jnp.tile(b_row, fold).reshape(1, lanes)

    # Fold `fold` timestamps per kernel row; pad t only if n is not a multiple of fold.
    n_rows = pl.cdiv(n, fold)
    n_flat = n_rows * fold
    if n_flat != n:
        t_flat = jnp.pad(t_flat, (0, n_flat - n))
    t2 = t_flat.reshape(n_rows, fold)

    # Tile selection:
    #  * VMEM-aware cap: per row, the (tile, fold) input block occupies a full 128-lane
    #    row in VMEM (lane padding) plus the (tile, lanes) output row; double-buffered.
    #  * Target >= ~4 grid steps for large n_rows (megacore sharding on v7x), but never
    #    below 256 rows/step so the ~0.35 us per-step overhead stays amortized.
    tile_rows = max(8, (int(tile_rows) // 8) * 8)
    row_bytes = 2 * (128 + lanes) * 4              # double-buffered (in + out) per row
    vmem_budget = 12 * 1024 * 1024                 # safe under v5e's 16 MiB scoped default
    tile_cap = min(tile_rows, max(8, (vmem_budget // row_bytes) // 8 * 8))
    tile = max(256, _round_up(pl.cdiv(n_rows, 4), 8))
    tile = min(tile, tile_cap)
    if tile >= n_rows:
        tile = n_rows                              # single full-extent block
    grid = (pl.cdiv(n_rows, tile),)                # partial last block is masked by Pallas

    out = pl.pallas_call(
        functools.partial(time_encode_kernel, fold=fold),
        out_shape=jax.ShapeDtypeStruct((n_rows, lanes), jnp.float32),
        grid=grid,
        in_specs=[
            pl.BlockSpec((tile, fold), lambda i: (i, 0)),
            pl.BlockSpec((fold, lanes), lambda i: (0, 0)),   # resident across grid
            pl.BlockSpec((1, lanes), lambda i: (0, 0)),      # resident across grid
        ],
        out_specs=pl.BlockSpec((tile, lanes), lambda i: (i, 0)),
        compiler_params=pltpu.CompilerParams(
            dimension_semantics=("parallel",)),
    )(t2, w_arg, b_arg)

    if fold == 1:
        # n_rows == n exactly; only slice lanes if we padded D.
        return out[:, :d] if d_pad != d else out
    out = out.reshape(n_flat, d)                    # free reshape (lanes == fold*d)
    return out[:n] if n_flat != n else out


def make_time_encode_params(emb_size):
    # Matches TimeEncode.reset_parameters():
    #   weight = 1 / 10 ** linspace(0, 9, emb_size)  (Linear(1,D).weight[:, 0])
    #   bias   = zeros(emb_size)
    w = (1.0 / 10 ** np.linspace(0, 9, emb_size, dtype=np.float32)).astype(np.float32)
    b = np.zeros((emb_size,), dtype=np.float32)
    return jnp.asarray(w), jnp.asarray(b)


def time_encode_ref(t, weight, bias):
    t2 = t.reshape(-1, 1).astype(jnp.float32)
    return jnp.cos(t2 * weight.reshape(1, -1) + bias.reshape(1, -1))


if __name__ == "__main__":
    emb_size = 32          # hidden=32
    batch, seq = 2, 8      # t has shape (batch, seq) of timestamps -> N = 16

    key = jax.random.PRNGKey(0)
    t = jax.random.uniform(key, (batch, seq), dtype=jnp.float32) * 100.0
    weight, bias = make_time_encode_params(emb_size)

    out = jax.block_until_ready(time_encode(t, weight, bias))
    ref = time_encode_ref(t, weight, bias)
    np.testing.assert_allclose(np.asarray(out), np.asarray(ref), rtol=1e-5, atol=1e-5)
    assert out.shape == (batch * seq, emb_size)

    # Multi-tile path with a ragged (masked) last block, no row padding / epilogue slice.
    t_big = jax.random.uniform(jax.random.PRNGKey(1), (9000,), dtype=jnp.float32) * 100.0
    out_big = jax.block_until_ready(time_encode(t_big, weight, bias))
    ref_big = time_encode_ref(t_big, weight, bias)
    np.testing.assert_allclose(np.asarray(out_big), np.asarray(ref_big), rtol=1e-5, atol=1e-5)
    assert out_big.shape == (9000, emb_size)

    # N not a multiple of fold -> minimal pad + epilogue slice path.
    t_odd = jax.random.uniform(jax.random.PRNGKey(2), (777,), dtype=jnp.float32) * 100.0
    out_odd = jax.block_until_ready(time_encode(t_odd, weight, bias))
    ref_odd = time_encode_ref(t_odd, weight, bias)
    np.testing.assert_allclose(np.asarray(out_odd), np.asarray(ref_odd), rtol=1e-5, atol=1e-5)
    assert out_odd.shape == (777, emb_size)

    # emb_size that neither divides nor is a multiple of 128 -> lane-padded path.
    w48, b48 = make_time_encode_params(48)
    t48 = jax.random.uniform(jax.random.PRNGKey(3), (100,), dtype=jnp.float32) * 100.0
    out48 = jax.block_until_ready(time_encode(t48, w48, b48))
    ref48 = time_encode_ref(t48, w48, b48)
    np.testing.assert_allclose(np.asarray(out48), np.asarray(ref48), rtol=1e-5, atol=1e-5)
    assert out48.shape == (100, 48)

    print("KERNEL_OK")
</pallas_src>

<mosaic_0001>
module attributes {stable_mosaic.version = 11 : i64} {
  func.func @time_encode_kernel(%arg0: i32, %arg1: memref<4x4xf32, #tpu.memory_space<vmem>>, %arg2: memref<4x128xf32, #tpu.memory_space<vmem>>, %arg3: memref<1x128xf32, #tpu.memory_space<vmem>>, %arg4: memref<4x128xf32, #tpu.memory_space<vmem>>) attributes {dimension_semantics = [#tpu.dimension_semantics<parallel>], iteration_bounds = array<i64: 1>, scalar_prefetch = 0 : i64, scratch_operands = 0 : i64, tpu.core_type = #tpu.core_type<tc>, window_params = [{transform_indices = @transform_0, window_bounds = array<i64: 4, 4>}, {pipeline_mode = #tpu.pipeline_mode<synchronous>, transform_indices = @transform_1, window_bounds = array<i64: 4, 128>}, {pipeline_mode = #tpu.pipeline_mode<synchronous>, transform_indices = @transform_2, window_bounds = array<i64: 1, 128>}, {transform_indices = @transform_3, window_bounds = array<i64: 4, 128>}]} {
    %c0 = arith.constant 0 : index
    %c0_0 = arith.constant 0 : index
    %0 = vector.load %arg1[%c0, %c0_0] : memref<4x4xf32, #tpu.memory_space<vmem>>, vector<4x4xf32>
    %c0_1 = arith.constant 0 : index
    %c0_2 = arith.constant 0 : index
    %1 = vector.load %arg2[%c0_1, %c0_2] : memref<4x128xf32, #tpu.memory_space<vmem>>, vector<4x128xf32>
    %2 = vector.extract_strided_slice %0 {offsets = [0, 0], sizes = [4, 1], strides = [1, 1]} : vector<4x4xf32> to vector<4x1xf32>
    %3 = vector.extract_strided_slice %1 {offsets = [0, 0], sizes = [1, 128], strides = [1, 1]} : vector<4x128xf32> to vector<1x128xf32>
    %4 = vector.broadcast %2 : vector<4x1xf32> to vector<4x128xf32>
    %5 = vector.broadcast %3 : vector<1x128xf32> to vector<4x128xf32>
    %6 = arith.mulf %4, %5 : vector<4x128xf32>
    %c0_3 = arith.constant 0 : index
    %c0_4 = arith.constant 0 : index
    %7 = vector.load %arg3[%c0_3, %c0_4] : memref<1x128xf32, #tpu.memory_space<vmem>>, vector<1x128xf32>
    %8 = vector.broadcast %7 : vector<1x128xf32> to vector<4x128xf32>
    %9 = arith.addf %6, %8 : vector<4x128xf32>
    %10 = vector.extract_strided_slice %0 {offsets = [0, 1], sizes = [4, 1], strides = [1, 1]} : vector<4x4xf32> to vector<4x1xf32>
    %11 = vector.extract_strided_slice %1 {offsets = [1, 0], sizes = [1, 128], strides = [1, 1]} : vector<4x128xf32> to vector<1x128xf32>
    %12 = vector.broadcast %10 : vector<4x1xf32> to vector<4x128xf32>
    %13 = vector.broadcast %11 : vector<1x128xf32> to vector<4x128xf32>
    %14 = arith.mulf %12, %13 : vector<4x128xf32>
    %15 = arith.addf %9, %14 : vector<4x128xf32>
    %16 = vector.extract_strided_slice %0 {offsets = [0, 2], sizes = [4, 1], strides = [1, 1]} : vector<4x4xf32> to vector<4x1xf32>
    %17 = vector.extract_strided_slice %1 {offsets = [2, 0], sizes = [1, 128], strides = [1, 1]} : vector<4x128xf32> to vector<1x128xf32>
    %18 = vector.broadcast %16 : vector<4x1xf32> to vector<4x128xf32>
    %19 = vector.broadcast %17 : vector<1x128xf32> to vector<4x128xf32>
    %20 = arith.mulf %18, %19 : vector<4x128xf32>
    %21 = arith.addf %15, %20 : vector<4x128xf32>
    %22 = vector.extract_strided_slice %0 {offsets = [0, 3], sizes = [4, 1], strides = [1, 1]} : vector<4x4xf32> to vector<4x1xf32>
    %23 = vector.extract_strided_slice %1 {offsets = [3, 0], sizes = [1, 128], strides = [1, 1]} : vector<4x128xf32> to vector<1x128xf32>
    %24 = vector.broadcast %22 : vector<4x1xf32> to vector<4x128xf32>
    %25 = vector.broadcast %23 : vector<1x128xf32> to vector<4x128xf32>
    %26 = arith.mulf %24, %25 : vector<4x128xf32>
    %27 = arith.addf %21, %26 : vector<4x128xf32>
    %28 = math.cos %27 : vector<4x128xf32>
    %c0_5 = arith.constant 0 : index
    %c0_6 = arith.constant 0 : index
    %29 = vector.load %arg4[%c0_5, %c0_6] : memref<4x128xf32, #tpu.memory_space<vmem>>, vector<4x128xf32>
    tpu.vector_store %arg4[%c0_5, %c0_6], %28 {strides = array<i32>} : memref<4x128xf32, #tpu.memory_space<vmem>>, vector<4x128xf32>,
    return
  }
  func.func @transform_0(%arg0: i32) -> (i32, i32) {
    %c0_i32 = arith.constant 0 : i32
    %c0_i32_0 = arith.constant 0 : i32
    return %arg0, %c0_i32 : i32, i32
  }
  func.func @transform_1(%arg0: i32) -> (i32, i32) {
    %c0_i32 = arith.constant 0 : i32
    %c0_i32_0 = arith.constant 0 : i32
    %c0_i32_1 = arith.constant 0 : i32
    return %c0_i32, %c0_i32_0 : i32, i32
  }
  func.func @transform_2(%arg0: i32) -> (i32, i32) {
    %c0_i32 = arith.constant 0 : i32
    %c0_i32_0 = arith.constant 0 : i32
    %c0_i32_1 = arith.constant 0 : i32
    return %c0_i32, %c0_i32_0 : i32, i32
  }
  func.func @transform_3(%arg0: i32) -> (i32, i32) {
    %c0_i32 = arith.constant 0 : i32
    %c0_i32_0 = arith.constant 0 : i32
    return %arg0, %c0_i32 : i32, i32
  }
}

</mosaic_0001>

<llo_original>
// kernel: tpu_custom_call.1
$region0: #{tpu_custom_call.1}
  #allocation0 [shape = 'u32[]', space=smem, size = 0x4, offset = 0x4, fixed_abs, tag = 'smem constant byte address 0x4 - core index']
  #allocation1 [shape = 'u32[144,128]{1,0:T(1,128)}', space=vmem, size = 0x12000, scoped, tag = 'internal scratch']
  %s0 = inlined_call_operand.hbm [shape: f32[4,4], index: 0, kind: input, shape index: {}]
  %s1 = inlined_call_operand.hbm [shape: f32[4,128], index: 1, kind: input, shape index: {}]
  %s2 = inlined_call_operand.vmem [shape: f32[1,128], index: 2, kind: input, shape index: {}]
  %s3 = inlined_call_operand.hbm [shape: f32[4,128], index: 3, kind: output, shape index: {}]
  %s4 = sld [smem:[#allocation0]]
  $region30: #{tpu_custom_call.1} parent=0
    _
  %s6 = ssub.s32 1, %s4
  %s7 = scalar_select 0, %s6, %s4
  $region1: #{tpu_custom_call.1} parent=0
    #allocation2 [shape = 'u8[2048]{0}', space=vmem, size = 0x800, scoped, tag = 'input window, operand 0, single buffered']
    #allocation3 [shape = 's32[1]{0}', space=sflag, size = 0x4, scoped, tag = 'scoped memory for tpu_custom_call.1']
    #allocation4 [shape = 's32[1]{0}', space=sflag, size = 0x4, scoped, tag = 'scoped memory for tpu_custom_call.1']
    #allocation5 [shape = 'u8[2048]{0}', space=vmem, size = 0x800, scoped, tag = 'input window, operand 1, single buffered']
    #allocation6 [shape = 's32[1]{0}', space=sflag, size = 0x4, scoped, tag = 'scoped memory for tpu_custom_call.1']
    #allocation7 [shape = 'u8[2048]{0}', space=vmem, size = 0x800, scoped, tag = 'output window, operand 0, single buffered']
    %8 = vsyncpa [#allocation3], 0
    %9 = vsyncpa [#allocation6], 0
    %10 = vsyncpa [#allocation4], 0
    // Predicated region
    $region2: #{tpu_custom_call.1} parent=1 // pred_check
      _
    $region3: #{tpu_custom_call.1} parent=1 // pred_check_branch
      %12 = sbr.rel (0) target = $region5
    $region4: #{tpu_custom_call.1} parent=1 // pred_region
      %s14 = ssub.s32 64, 64
      %15 = vsyncadd [#allocation3], %s14
      %s17 = sshll.u32 [#allocation2], 4
      %s18 = int_to_ptr.vmem [resolvable:$true] %s17
      %20 = dma.hbm_to_vmem [thread:$0]  %s0, 64, %s18, [#allocation3]
    $region5: #{tpu_custom_call.1} parent=1 // pred_fallthru
      _
    // Predicated region
    $region6: #{tpu_custom_call.1} parent=1 // pred_check
      _
    $region7: #{tpu_custom_call.1} parent=1 // pred_check_branch
      %22 = sbr.rel (0) target = $region9
    $region8: #{tpu_custom_call.1} parent=1 // pred_region
      %s24 = ssub.s32 64, 64
      %25 = vsyncadd [#allocation6], %s24
      %s27 = sshll.u32 [#allocation5], 4
      %s28 = int_to_ptr.vmem [resolvable:$true] %s27
      %30 = dma.hbm_to_vmem [thread:$0]  %s1, 64, %s28, [#allocation6]
    $region9: #{tpu_custom_call.1} parent=1 // pred_fallthru
      _
    // Predicated region
    $region10: #{tpu_custom_call.1} parent=1 // pred_check
      _
    $region11: #{tpu_custom_call.1} parent=1 // pred_check_branch
      %32 = sbr.rel (0) target = $region13
    $region12: #{tpu_custom_call.1} parent=1 // pred_region
      _
    $region13: #{tpu_custom_call.1} parent=1 // pred_fallthru
      _
    // Predicated region
    $region14: #{tpu_custom_call.1} parent=1 // pred_check
      _
    $region15: #{tpu_custom_call.1} parent=1 // pred_check_branch
      %34 = sbr.rel (0) target = $region17
    $region16: #{tpu_custom_call.1} parent=1 // pred_region
      %35 = dma.done [#allocation3], 64
    $region17: #{tpu_custom_call.1} parent=1 // pred_fallthru
      _
    // Predicated region
    $region18: #{tpu_custom_call.1} parent=1 // pred_check
      _
    $region19: #{tpu_custom_call.1} parent=1 // pred_check_branch
      %37 = sbr.rel (0) target = $region21
    $region20: #{tpu_custom_call.1} parent=1 // pred_region
      %38 = dma.done [#allocation6], 64
    $region21: #{tpu_custom_call.1} parent=1 // pred_fallthru
      _
    %v39 = vld [vmem:[#allocation2] sm:$0xf]
    %v40 = vld [vmem:[#allocation5] sm:$0xf]
    %42 = vset.pattern.permute.xlu0 0
    %43 = vperm.xlu0 %42, %v39
    %v44 = vpop.permute.xlu0 %43
    %v46 = vlaneseq
    %v47 = vshrl.u32 %v46, 7
    %v48 = vsub.s32 0, %v47
    %v49 = vrot.slane %v40, %v48
    %v50 = vmul.f32 %v44, %v49
    %v51 = vld [vmem:[%s2] sm:$0x1]
    %v53 = vlaneseq
    %v54 = vshrl.u32 %v53, 7
    %v55 = vsub.s32 0, %v54
    %v56 = vrot.slane %v51, %v55
    %v58 = vadd.f32 %v50, %v56
    %59 = vset.pattern.permute.xlu0 1
    %60 = vperm.xlu0 %59, %v39
    %v61 = vpop.permute.xlu0 %60
    %v63 = vlaneseq
    %v64 = vshrl.u32 %v63, 7
    %v65 = vsub.s32 1, %v64
    %v66 = vrot.slane %v40, %v65
    %v67 = vmul.f32 %v61, %v66
    %v68 = vadd.f32 %v58, %v67
    %69 = vset.pattern.permute.xlu0 2
    %70 = vperm.xlu0 %69, %v39
    %v71 = vpop.permute.xlu0 %70
    %v73 = vlaneseq
    %v74 = vshrl.u32 %v73, 7
    %v75 = vsub.s32 2, %v74
    %v76 = vrot.slane %v40, %v75
    %v77 = vmul.f32 %v71, %v76
    %v78 = vadd.f32 %v68, %v77
    %79 = vset.pattern.permute.xlu0 3
    %80 = vperm.xlu0 %79, %v39
    %v81 = vpop.permute.xlu0 %80
    %v83 = vlaneseq
    %v84 = vshrl.u32 %v83, 7
    %v85 = vsub.s32 3, %v84
    %v86 = vrot.slane %v40, %v85
    %v87 = vmul.f32 %v81, %v86
    %v88 = vadd.f32 %v78, %v87
    %v89 = vand.u32 2147483647, %v88
    %vm90 = vcmp.le.f32.partialorder %v89, 0.7853982
    %vm91 = vcmp.lt.s32.totalorder %v88, 0
    %v92 = vand.u32 %v88, 2139095040
    %v93 = vshrl.u32 %v92, 23
    %v94 = vsub.s32 %v93, 127
    %v95 = vand.u32 2147483647, %v88
    %v96 = vand.u32 %v95, 8388607
    %v97 = vor.u32 %v96, 8388608
    %v98 = vsub.s32 0, %v97
    %v99 = vadd.s32 %v94, 1
    %vm100 = vcmp.gt.s32.totalorder %v99, 0
    %v101 = vsel %vm100, %v99, 0
    %v102 = vshrl.u32 %v101, 5
    %v103 = vand.u32 %v101, 31
    %v104 = vsub.s32 32, %v103
    %v105 = vshrl.u32 683565275, %v104
    %v106 = vshll.u32 683565275, %v103
    %v107 = vshrl.u32 2475754826, %v104
    %v108 = vor.u32 %v106, %v107
    %v109 = vshll.u32 2475754826, %v103
    %v110 = vshrl.u32 2131351028, %v104
    %v111 = vor.u32 %v109, %v110
    %v112 = vshll.u32 2131351028, %v103
    %v113 = vshrl.u32 2102212464, %v104
    %v114 = vor.u32 %v112, %v113
    %v115 = vshll.u32 2102212464, %v103
    %v116 = vshrl.u32 920167782, %v104
    %v117 = vor.u32 %v115, %v116
    %v118 = vshll.u32 920167782, %v103
    %v119 = vshrl.u32 1326507024, %v104
    %v120 = vor.u32 %v118, %v119
    %vm121 = vcmp.lt.s32.totalorder %v102, 1
    %vm122 = vcmp.lt.s32.totalorder %v102, 2
    %vm123 = vcmp.lt.s32.totalorder %v102, 3
    %vm124 = vcmp.lt.s32.totalorder %v102, 4
    %v125 = vsel %vm121, %v105, %v108
    %v126 = vsel %vm124, %v114, 2102212464
    %v127 = vsel %vm123, %v111, %v126
    %v128 = vsel %vm122, %v125, %v127
    %v129 = vsel %vm121, %v108, %v111
    %v130 = vsel %vm124, %v117, 920167782
    %v131 = vsel %vm123, %v114, %v130
    %v132 = vsel %vm122, %v129, %v131
    %v133 = vsel %vm121, %v111, %v114
    %v134 = vsel %vm124, %v120, 1326507024
    %v135 = vsel %vm123, %v117, %v134
    %v136 = vsel %vm122, %v133, %v135
    %v137 = vshll.u32 %v97, 8
    %v138 = vmul.u32.u64.compose %v137, %v136
    %v139 = vextract.low.u32 %v138
    %v140 = vextract.high.u32 %v138
    %v141 = vmul.u32.u64.compose %v137, %v132
    %v142 = vextract.low.u32 %v141
    %v143 = vextract.high.u32 %v141
    %v144 = vmul.u32 %v137, %v128
    %v145 = vadd.s32 %v140, %v142
    %vm146 = vc.u32 %v140, %v142
    %v147 = vadd.s32 %v143, 1
    %v148 = vsel %vm146, %v147, %v143
    %v149 = vadd.s32 %v144, %v148
    %v150 = vadd.s32 %v149, 536870912
    %v151 = vshrl.u32 %v150, 30
    %v152 = vshll.u32 %v151, 30
    %v153 = vsub.s32 %v149, %v152
    %vm154 = vcmp.lt.s32.totalorder %v153, 0
    %v155 = vsub.s32 0, %v153
    %v156 = vsel %vm154, %v155, %v153
    %v157 = vclz %v156
    %v158 = vsub.s32 %v157, 2
    %vm159 = vcmp.gt.s32.totalorder 0, %v158
    %v160 = vsel %vm159, 0, %v158
    %v161 = vsub.s32 32, %v160
    %v162 = vshll.u32 %v153, %v160
    %v163 = vshrl.u32 %v145, %v161
    %v164 = vor.u32 %v162, %v163
    %v165 = vsub.s32 4294967266, %v160
    %v166 = vadd.s32 %v165, 127
    %v167 = vshll.u32 %v166, 23
    %v168 = vor.u32 4788187, %v167
    %v169 = vand.u32 2147483647, %v168
    %v171 = vcvt.s32.f32 %v164
    %v172 = vmul.f32 %v171, %v169
    %v173 = vxor.u32 %v172, 2147483648
    %v174 = vsel %vm91, %v173, %v172
    %v175 = vsub.s32 4, %v151
    %v176 = vsel %vm91, %v175, %v151
    %v177 = vsel %vm90, %v88, %v174
    %v178 = vsel %vm90, 0, %v176
    %v179 = vcosq.f32.pop %v177
    %v180 = vsinq.f32.pop %v177
    %vm181 = vweird.f32 %v88
    %v182 = vand.u32 %v178, 3
    %vm183 = vcmp.lt.s32.totalorder %v182, 2
    %vm184 = vcmp.eq.s32.totalorder %v182, 0
    %v185 = vxor.u32 %v180, 2147483648
    %v186 = vsel %vm184, %v179, %v185
    %vm187 = vcmp.eq.s32.totalorder %v182, 2
    %v188 = vxor.u32 %v179, 2147483648
    %v189 = vsel %vm187, %v188, %v180
    %v190 = vsel %vm183, %v186, %v189
    %v191 = vsel %vm181, nan, %v190
    %192 = vst [vmem:[#allocation7] sm:$0xf] %v191
    // Predicated region
    $region22: #{tpu_custom_call.1} parent=1 // pred_check
      _
    $region23: #{tpu_custom_call.1} parent=1 // pred_check_branch
      %194 = sbr.rel (0) target = $region25
    $region24: #{tpu_custom_call.1} parent=1 // pred_region
      %s196 = ssub.s32 64, 64
      %197 = vsyncadd [#allocation4], %s196
      %s199 = sshll.u32 [#allocation7], 4
      %s200 = int_to_ptr.vmem [resolvable:$true] %s199
      %202 = dma.vmem_to_hbm [thread:$0]  %s200, 64, %s3, [#allocation4]
    $region25: #{tpu_custom_call.1} parent=1 // pred_fallthru
      _
    // Predicated region
    $region26: #{tpu_custom_call.1} parent=1 // pred_check
      _
    $region27: #{tpu_custom_call.1} parent=1 // pred_check_branch
      %204 = sbr.rel (0) target = $region29
    $region28: #{tpu_custom_call.1} parent=1 // pred_region
      %205 = dma.done [#allocation4], 64
    $region29: #{tpu_custom_call.1} parent=1 // pred_fallthru
      _
    %206 = vsyncpa [#allocation3], 1
    %207 = vsyncpa [#allocation6], 1
    %208 = vsyncpa [#allocation4], 1

</llo_original>
